<compile_context>
chip_gen: v7x
topology: tpu7x:2x2x1
jax: 0.10.0
libtpu: 0.0.40
codegen_flags: <defaults>
</compile_context>

<pallas_src>
import math

import jax
import jax.numpy as jnp
from jax.experimental import pallas as pl
from jax.experimental.pallas import tpu as pltpu


def _round_up(n, m):
    return ((n + m - 1) // m) * m


def _mlp_kernel(x_ref, w1_ref, b1_ref, w2_ref, b2_ref, o_ref):
    # fc1 on the MXU: (TB, D) @ (D, Hp) -> (TB, Hp), f32 accumulation.
    h = jnp.dot(x_ref[...], w1_ref[...], preferred_element_type=jnp.float32)
    # bias + ReLU on the VPU (padded columns are 0 + 0 -> relu -> 0).
    h = jnp.maximum(h + b1_ref[...], 0.0)
    # fc2 (output_dim == 1): VPU multiply with the (1, Hp) w2 row + XLU lane
    # reduction instead of a 1-column MXU matmul.
    y = jnp.sum(h * w2_ref[...], axis=-1, keepdims=True)        # (TB, 1)
    y = y + b2_ref[0, 0]                                        # scalar bias from SMEM
    o_ref[...] = jax.nn.sigmoid(y)                              # EUP exp


def prepare_params(w1, b1, w2, b2, lane=128):
    """Pad hidden dim to a multiple of 128 lanes and reshape fc2 params.

    Inputs (already (in, out) layout): w1 (D, H), b1 (1, H), w2 (H, 1), b2 (1, 1).
    Returns w1_p (D, Hp), b1_p (1, Hp), w2_row (1, Hp), b2_s (1, 1).
    """
    D, H = w1.shape
    assert w2.shape == (H, 1), "kernel specialises output_dim == 1"
    Hp = _round_up(H, lane)
    w1_p = jnp.zeros((D, Hp), w1.dtype).at[:, :H].set(w1)
    b1_p = jnp.zeros((1, Hp), b1.dtype).at[:, :H].set(b1)
    w2_row = jnp.zeros((1, Hp), w2.dtype).at[:, :H].set(w2[:, 0][None, :])
    b2_s = b2.reshape(1, 1).astype(jnp.float32)
    return w1_p, b1_p, w2_row, b2_s


def sentiment_forward(x, w1_p, b1_p, w2_row, b2_s, *, block_b=512):
    """x: (B, D) f32; w1_p: (D, Hp); b1_p: (1, Hp); w2_row: (1, Hp); b2_s: (1, 1)."""
    B, D = x.shape
    Hp = w1_p.shape[1]

    # Batch tile: multiple of 8 sublanes, capped at block_b rows.
    TB = min(block_b, _round_up(B, 8))
    Bp = _round_up(B, TB)
    if Bp != B:
        x = jnp.pad(x, ((0, Bp - B), (0, 0)))
    nb = Bp // TB

    out = pl.pallas_call(
        _mlp_kernel,
        out_shape=jax.ShapeDtypeStruct((Bp, 1), jnp.float32),
        grid=(nb,),
        in_specs=[
            pl.BlockSpec((TB, D), lambda i: (i, 0)),            # x: batch-tiled
            pl.BlockSpec((D, Hp), lambda i: (0, 0)),            # W1: resident
            pl.BlockSpec((1, Hp), lambda i: (0, 0)),            # b1: resident
            pl.BlockSpec((1, Hp), lambda i: (0, 0)),            # w2 row: resident
            pl.BlockSpec(memory_space=pltpu.SMEM),              # b2 scalar in SMEM
        ],
        out_specs=pl.BlockSpec((TB, 1), lambda i: (i, 0)),
        compiler_params=pltpu.CompilerParams(
            dimension_semantics=("parallel",),                  # v7x: 2 TCs split batch
        ),
    )(x, w1_p, b1_p, w2_row, b2_s)
    return out[:B]


def init_params(key, input_dim, hidden_dim=64, output_dim=1):
    """Deterministic init matching nn.Linear's U(-1/sqrt(fan_in), 1/sqrt(fan_in)).

    Stored already transposed to (in, out)."""
    k1, k2, k3, k4 = jax.random.split(key, 4)
    bound1 = 1.0 / math.sqrt(input_dim)
    bound2 = 1.0 / math.sqrt(hidden_dim)
    w1 = jax.random.uniform(k1, (input_dim, hidden_dim), jnp.float32,
                            -bound1, bound1)
    b1 = jax.random.uniform(k2, (1, hidden_dim), jnp.float32, -bound1, bound1)
    w2 = jax.random.uniform(k3, (hidden_dim, output_dim), jnp.float32,
                            -bound2, bound2)
    b2 = jax.random.uniform(k4, (1, output_dim), jnp.float32, -bound2, bound2)
    return w1, b1, w2, b2


if __name__ == "__main__":
    key = jax.random.PRNGKey(0)
    kx, kp = jax.random.split(key)

    batch, input_dim, hidden_dim, output_dim = 8, 32, 64, 1
    x = jax.random.normal(kx, (batch, input_dim), jnp.float32)
    w1, b1, w2, b2 = init_params(kp, input_dim, hidden_dim, output_dim)

    params = prepare_params(w1, b1, w2, b2)
    out = sentiment_forward(x, *params)
    jax.block_until_ready(out)

    # Pure-JAX reference of the original (unpadded) math.
    ref = jax.nn.sigmoid(jnp.maximum(x @ w1 + b1, 0.0) @ w2 + b2)
    assert out.shape == (batch, output_dim)
    assert jnp.allclose(out, ref, atol=1e-5, rtol=1e-5)

    print("KERNEL_OK")
</pallas_src>

<mosaic_0001>
module attributes {stable_mosaic.version = 11 : i64} {
  func.func @_mlp_kernel(%arg0: i32, %arg1: memref<8x32xf32, #tpu.memory_space<vmem>>, %arg2: memref<32x128xf32, #tpu.memory_space<vmem>>, %arg3: memref<1x128xf32, #tpu.memory_space<vmem>>, %arg4: memref<1x128xf32, #tpu.memory_space<vmem>>, %arg5: memref<1x1xf32, #tpu.memory_space<smem>>, %arg6: memref<8x1xf32, #tpu.memory_space<vmem>>) attributes {dimension_semantics = [#tpu.dimension_semantics<parallel>], iteration_bounds = array<i64: 1>, scalar_prefetch = 0 : i64, scratch_operands = 0 : i64, tpu.core_type = #tpu.core_type<tc>, window_params = [{transform_indices = @transform_0, window_bounds = array<i64: 8, 32>}, {pipeline_mode = #tpu.pipeline_mode<synchronous>, transform_indices = @transform_1, window_bounds = array<i64: 32, 128>}, {pipeline_mode = #tpu.pipeline_mode<synchronous>, transform_indices = @transform_2, window_bounds = array<i64: 1, 128>}, {pipeline_mode = #tpu.pipeline_mode<synchronous>, transform_indices = @transform_3, window_bounds = array<i64: 1, 128>}, {transform_indices = @transform_4, window_bounds = array<i64: 1, 1>}, {transform_indices = @transform_5, window_bounds = array<i64: 8, 1>}]} {
    %c0 = arith.constant 0 : index
    %c0_0 = arith.constant 0 : index
    %0 = vector.load %arg1[%c0, %c0_0] : memref<8x32xf32, #tpu.memory_space<vmem>>, vector<8x32xf32>
    %c0_1 = arith.constant 0 : index
    %c0_2 = arith.constant 0 : index
    %1 = vector.load %arg2[%c0_1, %c0_2] : memref<32x128xf32, #tpu.memory_space<vmem>>, vector<32x128xf32>
    %cst = arith.constant dense<0.000000e+00> : vector<8x128xf32>
    %2 = tpu.matmul %0, %1, %cst {dimension_numbers = #tpu.dot_dimension_numbers<[1], [0], [0], [1], [0, 0, 1, 1], [], []>} : vector<8x32xf32>, vector<32x128xf32>, vector<8x128xf32> -> vector<8x128xf32>
    %c0_3 = arith.constant 0 : index
    %c0_4 = arith.constant 0 : index
    %3 = vector.load %arg3[%c0_3, %c0_4] : memref<1x128xf32, #tpu.memory_space<vmem>>, vector<1x128xf32>
    %4 = vector.broadcast %3 : vector<1x128xf32> to vector<8x128xf32>
    %5 = arith.addf %2, %4 : vector<8x128xf32>
    %cst_5 = arith.constant 0.000000e+00 : f32
    %6 = vector.broadcast %cst_5 : f32 to vector<8x128xf32>
    %7 = arith.maximumf %5, %6 : vector<8x128xf32>
    %c0_6 = arith.constant 0 : index
    %c0_7 = arith.constant 0 : index
    %8 = vector.load %arg4[%c0_6, %c0_7] : memref<1x128xf32, #tpu.memory_space<vmem>>, vector<1x128xf32>
    %9 = vector.broadcast %8 : vector<1x128xf32> to vector<8x128xf32>
    %10 = arith.mulf %7, %9 : vector<8x128xf32>
    %cst_8 = arith.constant dense<0.000000e+00> : vector<8xf32>
    %11 = vector.multi_reduction <add>, %10, %cst_8 [1] : vector<8x128xf32> to vector<8xf32>
    %12 = vector.shape_cast %11 : vector<8xf32> to vector<8x1xf32>
    %c0_9 = arith.constant 0 : index
    %c0_10 = arith.constant 0 : index
    %13 = memref.load %arg5[%c0_9, %c0_10] : memref<1x1xf32, #tpu.memory_space<smem>>
    %14 = vector.broadcast %13 : f32 to vector<8x1xf32>
    %15 = arith.addf %12, %14 : vector<8x1xf32>
    %16 = arith.negf %15 : vector<8x1xf32>
    %17 = math.exp %16 : vector<8x1xf32>
    %cst_11 = arith.constant 1.000000e+00 : f32
    %18 = vector.broadcast %cst_11 : f32 to vector<8x1xf32>
    %19 = arith.addf %18, %17 : vector<8x1xf32>
    %20 = arith.divf %18, %19 : vector<8x1xf32>
    %c0_12 = arith.constant 0 : index
    %c0_13 = arith.constant 0 : index
    %21 = vector.load %arg6[%c0_12, %c0_13] : memref<8x1xf32, #tpu.memory_space<vmem>>, vector<8x1xf32>
    tpu.vector_store %arg6[%c0_12, %c0_13], %20 {strides = array<i32>} : memref<8x1xf32, #tpu.memory_space<vmem>>, vector<8x1xf32>,
    return
  }
  func.func @transform_0(%arg0: i32) -> (i32, i32) {
    %c0_i32 = arith.constant 0 : i32
    %c0_i32_0 = arith.constant 0 : i32
    return %arg0, %c0_i32 : i32, i32
  }
  func.func @transform_1(%arg0: i32) -> (i32, i32) {
    %c0_i32 = arith.constant 0 : i32
    %c0_i32_0 = arith.constant 0 : i32
    %c0_i32_1 = arith.constant 0 : i32
    return %c0_i32, %c0_i32_0 : i32, i32
  }
  func.func @transform_2(%arg0: i32) -> (i32, i32) {
    %c0_i32 = arith.constant 0 : i32
    %c0_i32_0 = arith.constant 0 : i32
    %c0_i32_1 = arith.constant 0 : i32
    return %c0_i32, %c0_i32_0 : i32, i32
  }
  func.func @transform_3(%arg0: i32) -> (i32, i32) {
    %c0_i32 = arith.constant 0 : i32
    %c0_i32_0 = arith.constant 0 : i32
    %c0_i32_1 = arith.constant 0 : i32
    return %c0_i32, %c0_i32_0 : i32, i32
  }
  func.func @transform_4(%arg0: i32) -> (i32, i32) {
    %c0_i32 = arith.constant 0 : i32
    %c0_i32_0 = arith.constant 0 : i32
    %c0_i32_1 = arith.constant 0 : i32
    return %c0_i32, %c0_i32_0 : i32, i32
  }
  func.func @transform_5(%arg0: i32) -> (i32, i32) {
    %c0_i32 = arith.constant 0 : i32
    %c0_i32_0 = arith.constant 0 : i32
    return %arg0, %c0_i32 : i32, i32
  }
}

</mosaic_0001>

<llo_original>
// kernel: tpu_custom_call.1
$region0: #{tpu_custom_call.1}
  #allocation0 [shape = 'u32[]', space=smem, size = 0x4, offset = 0x4, fixed_abs, tag = 'smem constant byte address 0x4 - core index']
  #allocation1 [shape = 'u32[144,128]{1,0:T(1,128)}', space=vmem, size = 0x12000, scoped, tag = 'internal scratch']
  #allocation2 [shape = 'f32[1,1]{1,0:T(1,128)S(6)}', space=smem, size = 0x200, scoped, tag = 'scoped memory for tpu_custom_call.1']
  %s0 = inlined_call_operand.hbm [shape: f32[8,32], index: 0, kind: input, shape index: {}]
  %s1 = inlined_call_operand.hbm [shape: f32[32,128], index: 1, kind: input, shape index: {}]
  %s2 = inlined_call_operand.vmem [shape: f32[1,128], index: 2, kind: input, shape index: {}]
  %s3 = inlined_call_operand.vmem [shape: f32[1,128], index: 3, kind: input, shape index: {}]
  %s4 = inlined_call_operand.<no memory space> [shape: f32[1,1], index: 4, kind: input, shape index: {}]
  %s5 = inlined_call_operand.vmem [shape: f32[8,1], index: 5, kind: output, shape index: {}]
  %s6 = sld [smem:[#allocation0]]
  $region38: #{tpu_custom_call.1} parent=0
    _
  %s8 = ssub.s32 1, %s6
  %s9 = scalar_select 0, %s8, %s6
  %10 = sst [smem:[#allocation2]] %s4
  $region1: #{tpu_custom_call.1} parent=0
    #allocation3 [shape = 'u8[4096]{0}', space=vmem, size = 0x1000, scoped, tag = 'input window, operand 0, single buffered']
    #allocation4 [shape = 's32[1]{0}', space=sflag, size = 0x4, scoped, tag = 'scoped memory for tpu_custom_call.1']
    #allocation5 [shape = 'u8[16384]{0}', space=vmem, size = 0x4000, scoped, tag = 'input window, operand 1, single buffered']
    #allocation6 [shape = 's32[1]{0}', space=sflag, size = 0x4, scoped, tag = 'scoped memory for tpu_custom_call.1']
    %11 = vsyncpa [#allocation4], 0
    %12 = vsyncpa [#allocation6], 0
    // Predicated region
    $region2: #{tpu_custom_call.1} parent=1 // pred_check
      _
    $region3: #{tpu_custom_call.1} parent=1 // pred_check_branch
      %14 = sbr.rel (0) target = $region5
    $region4: #{tpu_custom_call.1} parent=1 // pred_region
      %s16 = ssub.s32 128, 128
      %17 = vsyncadd [#allocation4], %s16
      %s19 = sshll.u32 [#allocation3], 4
      %s20 = int_to_ptr.vmem [resolvable:$true] %s19
      %22 = dma.hbm_to_vmem [thread:$0]  %s0, 128, %s20, [#allocation4]
    $region5: #{tpu_custom_call.1} parent=1 // pred_fallthru
      _
    // Predicated region
    $region6: #{tpu_custom_call.1} parent=1 // pred_check
      _
    $region7: #{tpu_custom_call.1} parent=1 // pred_check_branch
      %24 = sbr.rel (0) target = $region9
    $region8: #{tpu_custom_call.1} parent=1 // pred_region
      %s26 = ssub.s32 512, 512
      %27 = vsyncadd [#allocation6], %s26
      %s28 = sshll.u32 [#allocation5], 4
      %s29 = int_to_ptr.vmem [resolvable:$true] %s28
      %34 = dma.hbm_to_vmem [thread:$0]  %s1, 512, %s29, [#allocation6], 128, 128, 8
    $region9: #{tpu_custom_call.1} parent=1 // pred_fallthru
      _
    // Predicated region
    $region10: #{tpu_custom_call.1} parent=1 // pred_check
      _
    $region11: #{tpu_custom_call.1} parent=1 // pred_check_branch
      %36 = sbr.rel (0) target = $region13
    $region12: #{tpu_custom_call.1} parent=1 // pred_region
      _
    $region13: #{tpu_custom_call.1} parent=1 // pred_fallthru
      _
    // Predicated region
    $region14: #{tpu_custom_call.1} parent=1 // pred_check
      _
    $region15: #{tpu_custom_call.1} parent=1 // pred_check_branch
      %38 = sbr.rel (0) target = $region17
    $region16: #{tpu_custom_call.1} parent=1 // pred_region
      _
    $region17: #{tpu_custom_call.1} parent=1 // pred_fallthru
      _
    // Predicated region
    $region18: #{tpu_custom_call.1} parent=1 // pred_check
      _
    $region19: #{tpu_custom_call.1} parent=1 // pred_check_branch
      %40 = sbr.rel (0) target = $region21
    $region20: #{tpu_custom_call.1} parent=1 // pred_region
      _
    $region21: #{tpu_custom_call.1} parent=1 // pred_fallthru
      _
    // Predicated region
    $region22: #{tpu_custom_call.1} parent=1 // pred_check
      _
    $region23: #{tpu_custom_call.1} parent=1 // pred_check_branch
      %42 = sbr.rel (0) target = $region25
    $region24: #{tpu_custom_call.1} parent=1 // pred_region
      %43 = dma.done [#allocation4], 128
    $region25: #{tpu_custom_call.1} parent=1 // pred_fallthru
      _
    // Predicated region
    $region26: #{tpu_custom_call.1} parent=1 // pred_check
      _
    $region27: #{tpu_custom_call.1} parent=1 // pred_check_branch
      %45 = sbr.rel (0) target = $region29
    $region28: #{tpu_custom_call.1} parent=1 // pred_region
      %46 = dma.done [#allocation6], 512
    $region29: #{tpu_custom_call.1} parent=1 // pred_fallthru
      _
    %v47 = vld [vmem:[#allocation3] sm:$0xff]
    %v48 = vld [vmem:[#allocation5] sm:$0xff]
    %v49 = vld [vmem:[#allocation5 + $0x8] sm:$0xff]
    %v50 = vld [vmem:[#allocation5 + $0x10] sm:$0xff]
    %v51 = vld [vmem:[#allocation5 + $0x18] sm:$0xff]
    %v52 = vld [vmem:[%s2] sm:$0x1]
    %v54 = vlaneseq
    %v55 = vshrl.u32 %v54, 7
    %v56 = vsub.s32 0, %v55
    %v57 = vrot.slane %v52, %v56
    %vm59 = vcmask 261120
    %v61 = vsel %vm59, %v47, 0
    %63 = vmatprep.subr.mxu0 0.0
    %64 = vmatpush1.msra.mxu0 %v48
    %65 = vmatprep.subr.mxu0 0.0
    %66 = vmatpush1.msra.mxu0 %v49
    %67 = vmatprep.subr.mxu0 0.0
    %68 = vmatpush1.msra.mxu0 %v50
    %69 = vmatprep.subr.mxu0 0.0
    %70 = vmatpush1.msra.mxu0 %v51
    %71 = vmatprep.subr.mxu0 0.0
    %72 = vmatpush1.msra.mxu0 0.0
    %73 = vmatprep.subr.mxu0 0.0
    %74 = vmatpush1.msra.mxu0 0.0
    %75 = vmatprep.subr.mxu0 0.0
    %76 = vmatpush1.msra.mxu0 0.0
    %77 = vmatprep.subr.mxu0 0.0
    %78 = vmatpush1.msra.mxu0 0.0
    %79 = vmatprep.subr.mxu0 0.0
    %80 = vmatpush1.msra.mxu0 0.0
    %81 = vmatprep.subr.mxu0 0.0
    %82 = vmatpush1.msra.mxu0 0.0
    %83 = vmatprep.subr.mxu0 0.0
    %84 = vmatpush1.msra.mxu0 0.0
    %85 = vmatprep.subr.mxu0 0.0
    %86 = vmatpush1.msra.mxu0 0.0
    %87 = vmatprep.subr.mxu0 0.0
    %88 = vmatpush1.msra.mxu0 0.0
    %89 = vmatprep.subr.mxu0 0.0
    %90 = vmatpush1.msra.mxu0 0.0
    %91 = vmatprep.subr.mxu0 0.0
    %92 = vmatpush1.msra.mxu0 0.0
    %93 = vmatprep.subr.mxu0 0.0
    %94 = vmatpush1.msra.mxu0 0.0
    %95 = vmatprep.subr.mxu0 0.0
    %96 = vmatpush1.msra.mxu0 0.0
    %97 = vmatprep.subr.mxu0 0.0
    %98 = vmatpush1.msra.mxu0 0.0
    %99 = vmatprep.subr.mxu0 0.0
    %100 = vmatpush1.msra.mxu0 0.0
    %101 = vmatprep.subr.mxu0 0.0
    %102 = vmatpush1.msra.mxu0 0.0
    %103 = vmatprep.subr.mxu0 0.0
    %104 = vmatpush1.msra.mxu0 0.0
    %105 = vmatprep.subr.mxu0 0.0
    %106 = vmatpush1.msra.mxu0 0.0
    %107 = vmatprep.subr.mxu0 0.0
    %108 = vmatpush1.msra.mxu0 0.0
    %109 = vmatprep.subr.mxu0 0.0
    %110 = vmatpush1.msra.mxu0 0.0
    %111 = vmatprep.subr.mxu0 0.0
    %112 = vmatpush1.msra.mxu0 0.0
    %113 = vmatprep.subr.mxu0 0.0
    %114 = vmatpush1.msra.mxu0 0.0
    %115 = vmatprep.subr.mxu0 0.0
    %116 = vmatpush1.msra.mxu0 0.0
    %117 = vmatprep.subr.mxu0 0.0
    %118 = vmatpush1.msra.mxu0 0.0
    %119 = vmatprep.subr.mxu0 0.0
    %120 = vmatpush1.msra.mxu0 0.0
    %121 = vmatprep.subr.mxu0 0.0
    %122 = vmatpush1.msra.mxu0 0.0
    %123 = vmatprep.subr.mxu0 0.0
    %124 = vmatpush1.msra.mxu0 0.0
    %125 = vmatprep.subr.mxu0 0.0
    %126 = vmatpush1.msra.mxu0 0.0
    %127 = vmatprep.mubr.f32.mxu0 0.0
    %128 = vmatmul.mubr.f32.gmra.mrb[0].mxu0 %v61
    %v129 = vpop.f32.mrb[0].mxu0
    %v130 = vadd.f32 %v57, %v129
    %v131 = vpop.f32.mrb[0].mxu0
    %132 = vdwg.mxu0
    %v133 = vmax.f32 %v130, 0.0
    %v134 = vld [vmem:[%s3] sm:$0x1]
    %v136 = vlaneseq
    %v137 = vshrl.u32 %v136, 7
    %v138 = vsub.s32 0, %v137
    %v139 = vrot.slane %v134, %v138
    %v141 = vmul.f32 %v133, %v139
    %142 = vadd.xlane.f32.xlu0 %v141
    %v143 = vpop.xlane.xlu0 %142
    %s144 = sld [smem:[#allocation2]]
    %v145 = vstv %s144
    %v146 = vadd.f32 %v143, %v145
    %v147 = vxor.u32 %v146, 2147483648
    %v148 = vmul.f32 %v147, 1.442695
    %v149 = vpow.pop %v148
    %v150 = vadd.f32 %v149, 1.0
    %v151 = vrcp.pop %v150
    %v152 = vmul.f32 1.0, %v151
    %vm153 = vcmask 7168
    %154 = vst.msk [vmem:[%s5] sm:$0xff] %vm153, %v152
    // Predicated region
    $region30: #{tpu_custom_call.1} parent=1 // pred_check
      _
    $region31: #{tpu_custom_call.1} parent=1 // pred_check_branch
      %156 = sbr.rel (0) target = $region33
    $region32: #{tpu_custom_call.1} parent=1 // pred_region
      _
    $region33: #{tpu_custom_call.1} parent=1 // pred_fallthru
      _
    // Predicated region
    $region34: #{tpu_custom_call.1} parent=1 // pred_check
      _
    $region35: #{tpu_custom_call.1} parent=1 // pred_check_branch
      %158 = sbr.rel (0) target = $region37
    $region36: #{tpu_custom_call.1} parent=1 // pred_region
      _
    $region37: #{tpu_custom_call.1} parent=1 // pred_fallthru
      _
    %159 = vsyncpa [#allocation4], 1
    %160 = vsyncpa [#allocation6], 1

</llo_original>
